<compile_context>
chip_gen: v5e
topology: v5e:2x2
jax: 0.10.0
libtpu: 0.0.40
codegen_flags: <defaults>
</compile_context>

<pallas_src>
import functools

import jax
import jax.numpy as jnp
from jax.experimental import pallas as pl
from jax.experimental.pallas import tpu as pltpu


def _local_rnn_layer_kernel(x_ref, halo_ref, gamma_ref, beta_ref,
                            wih_t_ref, whh_t_ref, bias_ref,
                            o_ref, y_ref,
                            *, window_size, d_true, eps, matmul_dtype):
    K = window_size
    j = pl.program_id(1)

    x_tile = x_ref[0].astype(jnp.float32)            # (TL, Dp)
    x_halo = halo_ref[0, 0].astype(jnp.float32)      # (K-1, Dp)
    TL, Dp = x_tile.shape

    # Tile plus left halo: row r corresponds to sequence position
    # j*TL - (K-1) + r.
    xc = jnp.concatenate([x_halo, x_tile], axis=0)   # (TL+K-1, Dp)

    # ---- LayerNorm over the true feature width (padded lanes masked) ----
    lane = jax.lax.broadcasted_iota(jnp.int32, (1, Dp), 1)
    lane_mask = lane < d_true
    inv_d = jnp.float32(1.0 / d_true)
    mean = jnp.sum(xc, axis=-1, keepdims=True) * inv_d        # padded lanes are 0
    dev = jnp.where(lane_mask, xc - mean, 0.0)
    var = jnp.sum(dev * dev, axis=-1, keepdims=True) * inv_d
    xn = dev * jax.lax.rsqrt(var + eps) * gamma_ref[...] + beta_ref[...]

    # Positions before the start of the sequence must be exactly zero
    # (the reference zero-pads the *normalized* sequence, not LayerNorm(0)).
    row = jax.lax.broadcasted_iota(jnp.int32, (TL + K - 1, 1), 0)
    pos = j * TL + row - (K - 1)
    xn = jnp.where(pos >= 0, xn, 0.0)

    # ---- Hoisted input projection: one matmul for all K window steps ----
    y_ref[...] = jnp.dot(xn.astype(matmul_dtype), wih_t_ref[...],
                         preferred_element_type=jnp.float32)   # (TL+K-1, Dp) f32

    bias = jnp.broadcast_to(bias_ref[...], (TL, Dp))            # bih + bhh, hoisted

    # ---- Windowed vanilla RNN, all TL windows advanced in lockstep ----
    # Step 0: h_{-1} == 0, skip the dead h @ Whh^T matmul.
    h = jnp.tanh(y_ref[pl.ds(0, TL), :] + bias)
    for s in range(1, K):                                       # unrolled (K small)
        pre = (y_ref[pl.ds(s, TL), :]
               + jnp.dot(h.astype(matmul_dtype), whh_t_ref[...],
                         preferred_element_type=jnp.float32)
               + bias)
        h = jnp.tanh(pre)

    # ---- Residual connection (dropout is identity at inference) ----
    o_ref[0] = (x_tile + h).astype(o_ref.dtype)


def local_rnn_layer(x, params, *, window_size, eps=1e-5,
                    seq_tile=256, matmul_dtype=jnp.bfloat16):
    B, L, D = x.shape
    K = window_size
    if K < 2:
        raise ValueError("window_size must be >= 2")  # TODO(synk): trivial K=1 path

    f32 = jnp.float32
    Dp = ((D + 127) // 128) * 128                     # lane-dense feature dim
    pad_d = Dp - D

    # Sequence tile: largest multiple of 8 <= seq_tile that divides L, else L.
    TL = L
    if L > seq_tile:
        for cand in range(seq_tile, 0, -8):
            if L % cand == 0:
                TL = cand
                break
    NT = L // TL

    # ---- wrapper-side layout plumbing (cheap, done once) ----
    x_pad = jnp.pad(x, ((0, 0), (0, 0), (0, pad_d)))            # (B, L, Dp)
    x_left = jnp.concatenate(
        [jnp.zeros((B, K - 1, Dp), x.dtype), x_pad], axis=1)    # (B, L+K-1, Dp)
    # halo[b, j] = raw x rows [j*TL-(K-1), j*TL)  (zeros before t=0)
    halo = jnp.stack([x_left[:, j * TL: j * TL + (K - 1), :] for j in range(NT)],
                     axis=1)                                    # (B, NT, K-1, Dp)

    gamma = jnp.pad(params["gamma"].astype(f32).reshape(1, D), ((0, 0), (0, pad_d)))
    beta = jnp.pad(params["beta"].astype(f32).reshape(1, D), ((0, 0), (0, pad_d)))
    bias = jnp.pad((params["bih"].astype(f32) + params["bhh"].astype(f32)).reshape(1, D),
                   ((0, 0), (0, pad_d)))
    # Pre-transposed, narrow-dtype weights (zero-padded rows/cols keep padded
    # lanes exactly zero through the whole recurrence).
    wih_t = jnp.pad(params["wih"].astype(f32).T, ((0, pad_d), (0, pad_d))).astype(matmul_dtype)
    whh_t = jnp.pad(params["whh"].astype(f32).T, ((0, pad_d), (0, pad_d))).astype(matmul_dtype)

    kernel = functools.partial(_local_rnn_layer_kernel,
                               window_size=K, d_true=D, eps=eps,
                               matmul_dtype=matmul_dtype)

    itemsize_x = jnp.dtype(x.dtype).itemsize
    itemsize_w = jnp.dtype(matmul_dtype).itemsize
    cost = pl.CostEstimate(
        flops=2 * B * (L + NT * (K - 1)) * Dp * Dp + 2 * B * L * Dp * Dp * (K - 1),
        transcendentals=B * L * Dp * K,
        bytes_accessed=(2 * B * L * Dp + B * NT * (K - 1) * Dp) * itemsize_x
                       + 2 * Dp * Dp * itemsize_w + 3 * Dp * 4)

    # Rough per-step VMEM footprint (double-buffered tiles, weights, scratch);
    # clamp the scoped-VMEM request so it is safe on v5e/v6e (128 MiB) and
    # v7x (64 MiB physical) alike.
    vmem_need = (4 * TL * Dp * itemsize_x                 # x in + out, 2 buffers each
                 + 2 * (K - 1) * Dp * itemsize_x          # halo, 2 buffers
                 + (TL + K - 1) * Dp * 4                  # hoisted-y scratch
                 + 2 * 2 * Dp * Dp * itemsize_w           # Wih^T, Whh^T
                 + 8 * Dp * 4)                            # gamma/beta/bias + slack
    vmem_limit = int(min(56 * 1024 * 1024, max(32 * 1024 * 1024, 2 * vmem_need)))

    vec_spec = lambda: pl.BlockSpec((1, Dp), lambda b, j: (0, 0))
    mat_spec = lambda: pl.BlockSpec((Dp, Dp), lambda b, j: (0, 0))

    out_pad = pl.pallas_call(
        kernel,
        out_shape=jax.ShapeDtypeStruct((B, L, Dp), x.dtype),
        grid=(B, NT),
        in_specs=[
            pl.BlockSpec((1, TL, Dp), lambda b, j: (b, j, 0)),           # x tile
            pl.BlockSpec((1, 1, K - 1, Dp), lambda b, j: (b, j, 0, 0)),  # halo
            vec_spec(), vec_spec(),                                      # gamma, beta
            mat_spec(), mat_spec(),                                      # Wih^T, Whh^T
            vec_spec(),                                                  # bih + bhh
        ],
        out_specs=pl.BlockSpec((1, TL, Dp), lambda b, j: (b, j, 0)),
        scratch_shapes=[pltpu.VMEM((TL + K - 1, Dp), jnp.float32)],      # hoisted y
        compiler_params=pltpu.CompilerParams(
            dimension_semantics=("parallel", "parallel"),
            vmem_limit_bytes=vmem_limit),
        cost_estimate=cost,
    )(x_pad, halo, gamma, beta, wih_t, whh_t, bias)

    return out_pad[..., :D]


def _reference(x, params, *, window_size, eps=1e-5, matmul_dtype=jnp.float32):
    """Pure-JAX reference of the same forward (matmul operand dtype matched)."""
    xf = x.astype(jnp.float32)
    mean = jnp.mean(xf, axis=-1, keepdims=True)
    var = jnp.mean(jnp.square(xf - mean), axis=-1, keepdims=True)
    xn = (xf - mean) * jax.lax.rsqrt(var + eps) * params["gamma"] + params["beta"]

    B, L, D = x.shape
    K = window_size
    wih_t = params["wih"].T.astype(matmul_dtype)
    whh_t = params["whh"].T.astype(matmul_dtype)
    h = jnp.zeros((B, L, D), jnp.float32)
    for s in range(K):
        shift = K - 1 - s
        if shift > 0:
            xin = jnp.concatenate(
                [jnp.zeros((B, shift, D), jnp.float32), xn[:, : L - shift, :]], axis=1)
        else:
            xin = xn
        pre = (jnp.einsum("bld,dk->blk", xin.astype(matmul_dtype), wih_t,
                          preferred_element_type=jnp.float32)
               + params["bih"]
               + jnp.einsum("bld,dk->blk", h.astype(matmul_dtype), whh_t,
                            preferred_element_type=jnp.float32)
               + params["bhh"])
        h = jnp.tanh(pre)
    return (xf + h).astype(x.dtype)


if __name__ == "__main__":
    B, L, D = 2, 16, 32          # batch, seq_len, d_model
    K = 4                        # window_size
    key = jax.random.PRNGKey(0)
    kx, k1, k2, k3, k4, kx2 = jax.random.split(key, 6)

    x = jax.random.normal(kx, (B, L, D), dtype=jnp.float32)

    scale = 1.0 / jnp.sqrt(jnp.float32(D))   # nn.RNN default uniform scale
    params = {
        "gamma": jnp.ones((1, D), jnp.float32),          # LayerNorm weight
        "beta": jnp.zeros((1, D), jnp.float32),          # LayerNorm bias
        "wih": jax.random.uniform(k1, (D, D), jnp.float32, -scale, scale),
        "whh": jax.random.uniform(k2, (D, D), jnp.float32, -scale, scale),
        "bih": jax.random.uniform(k3, (1, D), jnp.float32, -scale, scale),
        "bhh": jax.random.uniform(k4, (1, D), jnp.float32, -scale, scale),
    }

    # 1) f32 MXU operands: tight check vs the pure-JAX reference.
    out_f32 = jax.block_until_ready(
        local_rnn_layer(x, params, window_size=K, matmul_dtype=jnp.float32))
    ref_f32 = _reference(x, params, window_size=K, matmul_dtype=jnp.float32)
    assert out_f32.shape == (B, L, D)
    assert jnp.max(jnp.abs(out_f32 - ref_f32)) < 1e-4, "f32 mismatch vs reference"

    # 2) Default bf16 MXU operands (f32 accumulation): dtype-matched reference.
    out_bf16 = jax.block_until_ready(local_rnn_layer(x, params, window_size=K))
    ref_bf16 = _reference(x, params, window_size=K, matmul_dtype=jnp.bfloat16)
    assert out_bf16.shape == (B, L, D)
    assert jnp.max(jnp.abs(out_bf16 - ref_bf16)) < 1e-2, "bf16 mismatch vs reference"

    # 3) Multi-tile sequence (NT > 1): exercises the cross-tile halo path.
    L2 = 48
    x2 = jax.random.normal(kx2, (B, L2, D), dtype=jnp.float32)
    out_mt = jax.block_until_ready(
        local_rnn_layer(x2, params, window_size=K, seq_tile=16,
                        matmul_dtype=jnp.float32))
    ref_mt = _reference(x2, params, window_size=K, matmul_dtype=jnp.float32)
    assert out_mt.shape == (B, L2, D)
    assert jnp.max(jnp.abs(out_mt - ref_mt)) < 1e-4, "multi-tile mismatch vs reference"

    print("KERNEL_OK")
</pallas_src>

<mosaic_0001>
module attributes {stable_mosaic.version = 11 : i64} {
  func.func @_local_rnn_layer_kernel(%arg0: i32, %arg1: i32, %arg2: memref<1x16x128xf32, #tpu.memory_space<vmem>>, %arg3: memref<1x1x3x128xf32, #tpu.memory_space<vmem>>, %arg4: memref<1x128xf32, #tpu.memory_space<vmem>>, %arg5: memref<1x128xf32, #tpu.memory_space<vmem>>, %arg6: memref<128x128xf32, #tpu.memory_space<vmem>>, %arg7: memref<128x128xf32, #tpu.memory_space<vmem>>, %arg8: memref<1x128xf32, #tpu.memory_space<vmem>>, %arg9: memref<1x16x128xf32, #tpu.memory_space<vmem>>, %arg10: memref<19x128xf32, #tpu.memory_space<vmem>>) attributes {dimension_semantics = [#tpu.dimension_semantics<parallel>, #tpu.dimension_semantics<parallel>], iteration_bounds = array<i64: 2, 1>, scalar_prefetch = 0 : i64, scratch_operands = 1 : i64, tpu.core_type = #tpu.core_type<tc>, window_params = [{transform_indices = @transform_0, window_bounds = array<i64: 1, 16, 128>}, {transform_indices = @transform_1, window_bounds = array<i64: 1, 1, 3, 128>}, {pipeline_mode = #tpu.pipeline_mode<synchronous>, transform_indices = @transform_2, window_bounds = array<i64: 1, 128>}, {pipeline_mode = #tpu.pipeline_mode<synchronous>, transform_indices = @transform_3, window_bounds = array<i64: 1, 128>}, {pipeline_mode = #tpu.pipeline_mode<synchronous>, transform_indices = @transform_4, window_bounds = array<i64: 128, 128>}, {pipeline_mode = #tpu.pipeline_mode<synchronous>, transform_indices = @transform_5, window_bounds = array<i64: 128, 128>}, {pipeline_mode = #tpu.pipeline_mode<synchronous>, transform_indices = @transform_6, window_bounds = array<i64: 1, 128>}, {transform_indices = @transform_7, window_bounds = array<i64: 1, 16, 128>}]} {
    %c0 = arith.constant 0 : index
    %c0_0 = arith.constant 0 : index
    %c0_1 = arith.constant 0 : index
    %0 = vector.load %arg2[%c0, %c0_0, %c0_1] : memref<1x16x128xf32, #tpu.memory_space<vmem>>, vector<1x16x128xf32>
    %1 = vector.shape_cast %0 : vector<1x16x128xf32> to vector<16x128xf32>
    %c0_2 = arith.constant 0 : index
    %c0_3 = arith.constant 0 : index
    %c0_4 = arith.constant 0 : index
    %c0_5 = arith.constant 0 : index
    %2 = vector.load %arg3[%c0_2, %c0_3, %c0_4, %c0_5] : memref<1x1x3x128xf32, #tpu.memory_space<vmem>>, vector<1x1x3x128xf32>
    %3 = vector.shape_cast %2 : vector<1x1x3x128xf32> to vector<3x128xf32>
    %4 = tpu.concatenate %3, %1 in 0 : vector<3x128xf32>, vector<16x128xf32> -> vector<19x128xf32>
    %5 = tpu.iota {dimensions = array<i32: 1>} : vector<1x128xi32>
    %c32_i32 = arith.constant 32 : i32
    %6 = vector.broadcast %c32_i32 : i32 to vector<1x128xi32>
    %7 = arith.cmpi slt, %5, %6 : vector<1x128xi32>
    %cst = arith.constant dense<0.000000e+00> : vector<19xf32>
    %8 = vector.multi_reduction <add>, %4, %cst [1] : vector<19x128xf32> to vector<19xf32>
    %9 = vector.shape_cast %8 : vector<19xf32> to vector<19x1xf32>
    %cst_6 = arith.constant 3.125000e-02 : f32
    %10 = vector.broadcast %cst_6 : f32 to vector<19x1xf32>
    %11 = arith.mulf %9, %10 : vector<19x1xf32>
    %12 = vector.broadcast %11 : vector<19x1xf32> to vector<19x128xf32>
    %13 = arith.subf %4, %12 : vector<19x128xf32>
    %cst_7 = arith.constant 0.000000e+00 : f32
    %14 = vector.shape_cast %7 : vector<1x128xi1> to vector<1x128xi1>
    %15 = vector.broadcast %14 : vector<1x128xi1> to vector<19x128xi1>
    %16 = vector.broadcast %cst_7 : f32 to vector<19x128xf32>
    %17 = arith.select %15, %13, %16 : vector<19x128xi1>, vector<19x128xf32>
    %18 = arith.mulf %17, %17 : vector<19x128xf32>
    %cst_8 = arith.constant dense<0.000000e+00> : vector<19xf32>
    %19 = vector.multi_reduction <add>, %18, %cst_8 [1] : vector<19x128xf32> to vector<19xf32>
    %20 = vector.shape_cast %19 : vector<19xf32> to vector<19x1xf32>
    %cst_9 = arith.constant 3.125000e-02 : f32
    %21 = vector.broadcast %cst_9 : f32 to vector<19x1xf32>
    %22 = arith.mulf %20, %21 : vector<19x1xf32>
    %cst_10 = arith.constant 9.99999974E-6 : f32
    %23 = vector.broadcast %cst_10 : f32 to vector<19x1xf32>
    %24 = arith.addf %22, %23 : vector<19x1xf32>
    %25 = math.rsqrt %24 : vector<19x1xf32>
    %26 = vector.broadcast %25 : vector<19x1xf32> to vector<19x128xf32>
    %27 = arith.mulf %17, %26 : vector<19x128xf32>
    %c0_11 = arith.constant 0 : index
    %c0_12 = arith.constant 0 : index
    %28 = vector.load %arg4[%c0_11, %c0_12] : memref<1x128xf32, #tpu.memory_space<vmem>>, vector<1x128xf32>
    %29 = vector.broadcast %28 : vector<1x128xf32> to vector<19x128xf32>
    %30 = arith.mulf %27, %29 : vector<19x128xf32>
    %c0_13 = arith.constant 0 : index
    %c0_14 = arith.constant 0 : index
    %31 = vector.load %arg5[%c0_13, %c0_14] : memref<1x128xf32, #tpu.memory_space<vmem>>, vector<1x128xf32>
    %32 = vector.broadcast %31 : vector<1x128xf32> to vector<19x128xf32>
    %33 = arith.addf %30, %32 : vector<19x128xf32>
    %34 = tpu.iota {dimensions = array<i32: 0>} : vector<19x1xi32>
    %c16_i32 = arith.constant 16 : i32
    %35 = arith.muli %arg1, %c16_i32 : i32
    %36 = vector.broadcast %35 : i32 to vector<19x1xi32>
    %37 = arith.addi %36, %34 : vector<19x1xi32>
    %c3_i32 = arith.constant 3 : i32
    %38 = vector.broadcast %c3_i32 : i32 to vector<19x1xi32>
    %39 = arith.subi %37, %38 : vector<19x1xi32>
    %c0_i32 = arith.constant 0 : i32
    %40 = vector.broadcast %c0_i32 : i32 to vector<19x1xi32>
    %41 = arith.cmpi sge, %39, %40 : vector<19x1xi32>
    %cst_15 = arith.constant 0.000000e+00 : f32
    %42 = vector.shape_cast %41 : vector<19x1xi1> to vector<19x1xi1>
    %43 = vector.broadcast %42 : vector<19x1xi1> to vector<19x128xi1>
    %44 = vector.broadcast %cst_15 : f32 to vector<19x128xf32>
    %45 = arith.select %43, %33, %44 : vector<19x128xi1>, vector<19x128xf32>
    %c0_16 = arith.constant 0 : index
    %c0_17 = arith.constant 0 : index
    %46 = vector.load %arg6[%c0_16, %c0_17] : memref<128x128xf32, #tpu.memory_space<vmem>>, vector<128x128xf32>
    %cst_18 = arith.constant dense<0.000000e+00> : vector<19x128xf32>
    %47 = tpu.matmul %45, %46, %cst_18 {dimension_numbers = #tpu.dot_dimension_numbers<[1], [0], [0], [1], [0, 0, 1, 1], [], []>} : vector<19x128xf32>, vector<128x128xf32>, vector<19x128xf32> -> vector<19x128xf32>
    %c0_19 = arith.constant 0 : index
    %c0_20 = arith.constant 0 : index
    %48 = vector.load %arg10[%c0_19, %c0_20] : memref<19x128xf32, #tpu.memory_space<vmem>>, vector<19x128xf32>
    tpu.vector_store %arg10[%c0_19, %c0_20], %47 {strides = array<i32>} : memref<19x128xf32, #tpu.memory_space<vmem>>, vector<19x128xf32>,
    %c0_21 = arith.constant 0 : index
    %c0_22 = arith.constant 0 : index
    %49 = vector.load %arg8[%c0_21, %c0_22] : memref<1x128xf32, #tpu.memory_space<vmem>>, vector<1x128xf32>
    %50 = vector.shape_cast %49 : vector<1x128xf32> to vector<1x128xf32>
    %51 = vector.broadcast %50 : vector<1x128xf32> to vector<16x128xf32>
    %c0_23 = arith.constant 0 : index
    %c0_24 = arith.constant 0 : index
    %52 = vector.load %arg10[%c0_23, %c0_24] : memref<19x128xf32, #tpu.memory_space<vmem>>, vector<16x128xf32>
    %53 = arith.addf %52, %51 : vector<16x128xf32>
    %54 = math.tanh %53 : vector<16x128xf32>
    %c1 = arith.constant 1 : index
    %c0_25 = arith.constant 0 : index
    %55 = vector.load %arg10[%c1, %c0_25] : memref<19x128xf32, #tpu.memory_space<vmem>>, vector<16x128xf32>
    %c0_26 = arith.constant 0 : index
    %c0_27 = arith.constant 0 : index
    %56 = vector.load %arg7[%c0_26, %c0_27] : memref<128x128xf32, #tpu.memory_space<vmem>>, vector<128x128xf32>
    %cst_28 = arith.constant dense<0.000000e+00> : vector<16x128xf32>
    %57 = tpu.matmul %54, %56, %cst_28 {dimension_numbers = #tpu.dot_dimension_numbers<[1], [0], [0], [1], [0, 0, 1, 1], [], []>} : vector<16x128xf32>, vector<128x128xf32>, vector<16x128xf32> -> vector<16x128xf32>
    %58 = arith.addf %55, %57 : vector<16x128xf32>
    %59 = arith.addf %58, %51 : vector<16x128xf32>
    %60 = math.tanh %59 : vector<16x128xf32>
    %c2 = arith.constant 2 : index
    %c0_29 = arith.constant 0 : index
    %61 = vector.load %arg10[%c2, %c0_29] : memref<19x128xf32, #tpu.memory_space<vmem>>, vector<16x128xf32>
    %c0_30 = arith.constant 0 : index
    %c0_31 = arith.constant 0 : index
    %62 = vector.load %arg7[%c0_30, %c0_31] : memref<128x128xf32, #tpu.memory_space<vmem>>, vector<128x128xf32>
    %cst_32 = arith.constant dense<0.000000e+00> : vector<16x128xf32>
    %63 = tpu.matmul %60, %62, %cst_32 {dimension_numbers = #tpu.dot_dimension_numbers<[1], [0], [0], [1], [0, 0, 1, 1], [], []>} : vector<16x128xf32>, vector<128x128xf32>, vector<16x128xf32> -> vector<16x128xf32>
    %64 = arith.addf %61, %63 : vector<16x128xf32>
    %65 = arith.addf %64, %51 : vector<16x128xf32>
    %66 = math.tanh %65 : vector<16x128xf32>
    %c3 = arith.constant 3 : index
    %c0_33 = arith.constant 0 : index
    %67 = vector.load %arg10[%c3, %c0_33] : memref<19x128xf32, #tpu.memory_space<vmem>>, vector<16x128xf32>
    %c0_34 = arith.constant 0 : index
    %c0_35 = arith.constant 0 : index
    %68 = vector.load %arg7[%c0_34, %c0_35] : memref<128x128xf32, #tpu.memory_space<vmem>>, vector<128x128xf32>
    %cst_36 = arith.constant dense<0.000000e+00> : vector<16x128xf32>
    %69 = tpu.matmul %66, %68, %cst_36 {dimension_numbers = #tpu.dot_dimension_numbers<[1], [0], [0], [1], [0, 0, 1, 1], [], []>} : vector<16x128xf32>, vector<128x128xf32>, vector<16x128xf32> -> vector<16x128xf32>
    %70 = arith.addf %67, %69 : vector<16x128xf32>
    %71 = arith.addf %70, %51 : vector<16x128xf32>
    %72 = math.tanh %71 : vector<16x128xf32>
    %73 = arith.addf %1, %72 : vector<16x128xf32>
    %c0_37 = arith.constant 0 : index
    %c0_38 = arith.constant 0 : index
    %c0_39 = arith.constant 0 : index
    %74 = vector.load %arg9[%c0_37, %c0_38, %c0_39] : memref<1x16x128xf32, #tpu.memory_space<vmem>>, vector<1x16x128xf32>
    %75 = vector.shape_cast %74 : vector<1x16x128xf32> to vector<16x128xf32>
    %76 = vector.shape_cast %73 : vector<16x128xf32> to vector<1x16x128xf32>
    tpu.vector_store %arg9[%c0_37, %c0_38, %c0_39], %76 {strides = array<i32>} : memref<1x16x128xf32, #tpu.memory_space<vmem>>, vector<1x16x128xf32>,
    return
  }
  func.func @transform_0(%arg0: i32, %arg1: i32) -> (i32, i32, i32) {
    %c0_i32 = arith.constant 0 : i32
    %c0_i32_0 = arith.constant 0 : i32
    return %arg0, %arg1, %c0_i32 : i32, i32, i32
  }
  func.func @transform_1(%arg0: i32, %arg1: i32) -> (i32, i32, i32, i32) {
    %c0_i32 = arith.constant 0 : i32
    %c0_i32_0 = arith.constant 0 : i32
    %c0_i32_1 = arith.constant 0 : i32
    return %arg0, %arg1, %c0_i32, %c0_i32_0 : i32, i32, i32, i32
  }
  func.func @transform_2(%arg0: i32, %arg1: i32) -> (i32, i32) {
    %c0_i32 = arith.constant 0 : i32
    %c0_i32_0 = arith.constant 0 : i32
    %c0_i32_1 = arith.constant 0 : i32
    return %c0_i32, %c0_i32_0 : i32, i32
  }
  func.func @transform_3(%arg0: i32, %arg1: i32) -> (i32, i32) {
    %c0_i32 = arith.constant 0 : i32
    %c0_i32_0 = arith.constant 0 : i32
    %c0_i32_1 = arith.constant 0 : i32
    return %c0_i32, %c0_i32_0 : i32, i32
  }
  func.func @transform_4(%arg0: i32, %arg1: i32) -> (i32, i32) {
    %c0_i32 = arith.constant 0 : i32
    %c0_i32_0 = arith.constant 0 : i32
    %c0_i32_1 = arith.constant 0 : i32
    return %c0_i32, %c0_i32_0 : i32, i32
  }
  func.func @transform_5(%arg0: i32, %arg1: i32) -> (i32, i32) {
    %c0_i32 = arith.constant 0 : i32
    %c0_i32_0 = arith.constant 0 : i32
    %c0_i32_1 = arith.constant 0 : i32
    return %c0_i32, %c0_i32_0 : i32, i32
  }
  func.func @transform_6(%arg0: i32, %arg1: i32) -> (i32, i32) {
    %c0_i32 = arith.constant 0 : i32
    %c0_i32_0 = arith.constant 0 : i32
    %c0_i32_1 = arith.constant 0 : i32
    return %c0_i32, %c0_i32_0 : i32, i32
  }
  func.func @transform_7(%arg0: i32, %arg1: i32) -> (i32, i32, i32) {
    %c0_i32 = arith.constant 0 : i32
    %c0_i32_0 = arith.constant 0 : i32
    return %arg0, %arg1, %c0_i32 : i32, i32, i32
  }
}

</mosaic_0001>

<llo_original>
// kernel: tpu_custom_call.1
$region0: #{tpu_custom_call.1}
  #allocation0 [shape = 'u32[]', space=smem, size = 0x4, offset = 0x4, fixed_abs, tag = 'smem constant byte address 0x4 - core index']
  #allocation1 [shape = 'u32[72,128]{1,0:T(1,128)}', space=vmem, size = 0x9000, scoped, tag = 'internal scratch']
  #allocation2 [shape = 'f32[19,128]{1,0:T(8,128)}', space=vmem, size = 0x3000, scoped, tag = 'scratch operand']
  %s0 = inlined_call_operand.hbm [shape: f32[2,16,128], index: 0, kind: input, shape index: {}]
  %s1 = inlined_call_operand.vmem [shape: f32[2,1,3,128], index: 1, kind: input, shape index: {}]
  %s2 = inlined_call_operand.vmem [shape: f32[1,128], index: 2, kind: input, shape index: {}]
  %s3 = inlined_call_operand.vmem [shape: f32[1,128], index: 3, kind: input, shape index: {}]
  %s4 = inlined_call_operand.hbm [shape: f32[128,128], index: 4, kind: input, shape index: {}]
  %s5 = inlined_call_operand.hbm [shape: f32[128,128], index: 5, kind: input, shape index: {}]
  %s6 = inlined_call_operand.vmem [shape: f32[1,128], index: 6, kind: input, shape index: {}]
  %s7 = inlined_call_operand.hbm [shape: f32[2,16,128], index: 7, kind: output, shape index: {}]
  %s8 = sld [smem:[#allocation0]]
  $region73: #{tpu_custom_call.1} parent=0
    _
  %s10 = ssub.s32 1, %s8
  %s11 = scalar_select 0, %s10, %s8
  $region1: #{tpu_custom_call.1} parent=0
    #allocation3 [shape = 'u8[16384]{0}', space=vmem, size = 0x4000, scoped, tag = 'input window, operand 0']
    #allocation4 [shape = 's32[2]{0}', space=sflag, size = 0x8, scoped, tag = 'scoped memory for tpu_custom_call.1']
    #allocation5 [shape = 's32[2]{0}', space=sflag, size = 0x8, scoped, tag = 'scoped memory for tpu_custom_call.1']
    #allocation6 [shape = 'u8[65536]{0}', space=vmem, size = 0x10000, scoped, tag = 'input window, operand 4, single buffered']
    #allocation7 [shape = 's32[1]{0}', space=sflag, size = 0x4, scoped, tag = 'scoped memory for tpu_custom_call.1']
    #allocation8 [shape = 'u8[65536]{0}', space=vmem, size = 0x10000, scoped, tag = 'input window, operand 5, single buffered']
    #allocation9 [shape = 'u8[16384]{0}', space=vmem, size = 0x4000, scoped, tag = 'output window, operand 0']
    %12 = vsyncpa [#allocation4], 0
    %s13 = scalar_lea.sflag [#allocation4], 1
    %14 = vsyncpa %s13, 0
    %15 = vsyncpa [#allocation7], 0
    %16 = vsyncpa [#allocation5], 0
    %s17 = scalar_lea.sflag [#allocation5], 1
    %18 = vsyncpa %s17, 0
    loop: start=0, step=1, limit=4
    $region2: #{tpu_custom_call.1} parent=1 // loop_pre_header
      _
    $region3: #{tpu_custom_call.1} parent=1 // loop_header
      %s20 = sphi 0, %s24
      %p21 = scmp.ge.s32.totalorder %s20, 4
      %s27 = sphi 0, %s39
      %s28 = sphi 0, %s35
      %s29 = sphi 0, %s27
      %s30 = sphi 0, %s28
      %s31 = sphi 0, %s29
      %s32 = sphi 0, %s30
      %s44 = sphi 0, %s46
      %s47 = sphi 0, %s44
      %s48 = sphi 0, %s47
      %s64 = sphi 0, %s48
      %s72 = sphi 0, %s74
      %s75 = sphi 0, %s72
      %s76 = sphi 0, %s75
      %s92 = sphi 0, %s76
      %s96 = sphi 0, %s96
      %s98 = sphi 0, %s96
      %s99 = sphi 0, %s98
      %s113 = sphi 0, %s99
      %s117 = sphi 0, %s117
      %s119 = sphi 0, %s117
      %s120 = sphi 0, %s119
      %s134 = sphi 0, %s120
      %s138 = sphi 0, %s138
      %s140 = sphi 0, %s138
      %s141 = sphi 0, %s140
      %s155 = sphi 0, %s141
      %s159 = sphi 0, %s159
      %s161 = sphi 0, %s159
      %s162 = sphi 0, %s161
      %s176 = sphi 0, %s162
      %s180 = sphi 0, %s180
      %s182 = sphi 0, %s180
      %s183 = sphi 0, %s182
      %s197 = sphi 0, %s183
      %s205 = sphi 0, %s207
      %s208 = sphi 0, %s205
      %s209 = sphi 0, %s208
      %s225 = sphi 0, %s209
    $region4: #{tpu_custom_call.1} parent=1 // loop_header_branch
      %23 = sbr.rel (%p21) target = $region8
    $region5: #{tpu_custom_call.1} parent=1 // loop_body
      %s25 = ssub.s32 %s20, 1
      %s26 = ssub.s32 %s20, 2
      %s33 = sadd.s32 1, %s28
      %p34 = scmp.ge.s32.totalorder %s33, 1
      %s35 = scalar_select %p34, 0, %s33
      %s36 = sadd.s32 1, %s27
      %s37 = scalar_select %p34, %s36, %s27
      %p38 = scmp.ge.s32.totalorder %s37, 2
      %s39 = scalar_select %p38, 0, %s37
      %s40 = ssub.s32 %s27, %s39
      %s41 = ssub.s32 %s28, %s35
      %s42 = sor.u32 %s40, %s41
      %p43 = scmp.eq.s32.totalorder %s42, 0
      %s45 = sadd.s32 %s44, 1
      %s46 = scalar_select %p43, %s44, %s45
      %p49 = pneg %p43
      %p50 = scmp.eq.s32.totalorder %s20, 1
      %p51 = por %p49, %p50
      %p52 = scmp.ne.s32.totalorder %s44, %s47
      %p53 = scmp.eq.s32.totalorder %s20, 0
      %p54 = por %p52, %p53
      %p55 = scmp.ne.s32.totalorder %s44, %s47
      %p56 = scmp.eq.s32.totalorder %s25, 1
      %p57 = por %p55, %p56
      %p58 = scmp.ne.s32.totalorder %s47, %s48
      %p59 = scmp.eq.s32.totalorder %s25, 0
      %p60 = por %p58, %p59
      %p61 = scmp.ne.s32.totalorder %s47, %s48
      %p62 = scmp.eq.s32.totalorder %s26, 1
      %p63 = por %p61, %p62
      %p65 = scmp.ne.s32.totalorder %s48, %s64
      %p66 = scmp.eq.s32.totalorder %s26, 0
      %p67 = por %p65, %p66
      %s68 = ssub.s32 %s27, %s39
      %s69 = ssub.s32 %s28, %s35
      %s70 = sor.u32 %s68, %s69
      %p71 = scmp.eq.s32.totalorder %s70, 0
      %s73 = sadd.s32 %s72, 1
      %s74 = scalar_select %p71, %s72, %s73
      %p77 = pneg %p71
      %p78 = scmp.eq.s32.totalorder %s20, 1
      %p79 = por %p77, %p78
      %p80 = scmp.ne.s32.totalorder %s72, %s75
      %p81 = scmp.eq.s32.totalorder %s20, 0
      %p82 = por %p80, %p81
      %p83 = scmp.ne.s32.totalorder %s72, %s75
      %p84 = scmp.eq.s32.totalorder %s25, 1
      %p85 = por %p83, %p84
      %p86 = scmp.ne.s32.totalorder %s75, %s76
      %p87 = scmp.eq.s32.totalorder %s25, 0
      %p88 = por %p86, %p87
      %p89 = scmp.ne.s32.totalorder %s75, %s76
      %p90 = scmp.eq.s32.totalorder %s26, 1
      %p91 = por %p89, %p90
      %p93 = scmp.ne.s32.totalorder %s76, %s92
      %p94 = scmp.eq.s32.totalorder %s26, 0
      %p95 = por %p93, %p94
      %s97 = sadd.s32 %s96, 1
      %p100 = scmp.eq.s32.totalorder %s20, 1
      %p101 = scmp.ne.s32.totalorder %s96, %s98
      %p102 = scmp.eq.s32.totalorder %s20, 0
      %p103 = por %p101, %p102
      %p104 = scmp.ne.s32.totalorder %s96, %s98
      %p105 = scmp.eq.s32.totalorder %s25, 1
      %p106 = por %p104, %p105
      %p107 = scmp.ne.s32.totalorder %s98, %s99
      %p108 = scmp.eq.s32.totalorder %s25, 0
      %p109 = por %p107, %p108
      %p110 = scmp.ne.s32.totalorder %s98, %s99
      %p111 = scmp.eq.s32.totalorder %s26, 1
      %p112 = por %p110, %p111
      %p114 = scmp.ne.s32.totalorder %s99, %s113
      %p115 = scmp.eq.s32.totalorder %s26, 0
      %p116 = por %p114, %p115
      %s118 = sadd.s32 %s117, 1
      %p121 = scmp.eq.s32.totalorder %s20, 1
      %p122 = scmp.ne.s32.totalorder %s117, %s119
      %p123 = scmp.eq.s32.totalorder %s20, 0
      %p124 = por %p122, %p123
      %p125 = scmp.ne.s32.totalorder %s117, %s119
      %p126 = scmp.eq.s32.totalorder %s25, 1
      %p127 = por %p125, %p126
      %p128 = scmp.ne.s32.totalorder %s119, %s120
      %p129 = scmp.eq.s32.totalorder %s25, 0
      %p130 = por %p128, %p129
      %p131 = scmp.ne.s32.totalorder %s119, %s120
      %p132 = scmp.eq.s32.totalorder %s26, 1
      %p133 = por %p131, %p132
      %p135 = scmp.ne.s32.totalorder %s120, %s134
      %p136 = scmp.eq.s32.totalorder %s26, 0
      %p137 = por %p135, %p136
      %s139 = sadd.s32 %s138, 1
      %p142 = scmp.eq.s32.totalorder %s20, 1
      %p143 = scmp.ne.s32.totalorder %s138, %s140
      %p144 = scmp.eq.s32.totalorder %s20, 0
      %p145 = por %p143, %p144
      %p146 = scmp.ne.s32.totalorder %s138, %s140
      %p147 = scmp.eq.s32.totalorder %s25, 1
      %p148 = por %p146, %p147
      %p149 = scmp.ne.s32.totalorder %s140, %s141
      %p150 = scmp.eq.s32.totalorder %s25, 0
      %p151 = por %p149, %p150
      %p152 = scmp.ne.s32.totalorder %s140, %s141
      %p153 = scmp.eq.s32.totalorder %s26, 1
      %p154 = por %p152, %p153
      %p156 = scmp.ne.s32.totalorder %s141, %s155
      %p157 = scmp.eq.s32.totalorder %s26, 0
      %p158 = por %p156, %p157
      %s160 = sadd.s32 %s159, 1
      %p163 = scmp.eq.s32.totalorder %s20, 1
      %p164 = scmp.ne.s32.totalorder %s159, %s161
      %p165 = scmp.eq.s32.totalorder %s20, 0
      %p166 = por %p164, %p165
      %p167 = scmp.ne.s32.totalorder %s159, %s161
      %p168 = scmp.eq.s32.totalorder %s25, 1
      %p169 = por %p167, %p168
      %p170 = scmp.ne.s32.totalorder %s161, %s162
      %p171 = scmp.eq.s32.totalorder %s25, 0
      %p172 = por %p170, %p171
      %p173 = scmp.ne.s32.totalorder %s161, %s162
      %p174 = scmp.eq.s32.totalorder %s26, 1
      %p175 = por %p173, %p174
      %p177 = scmp.ne.s32.totalorder %s162, %s176
      %p178 = scmp.eq.s32.totalorder %s26, 0
      %p179 = por %p177, %p178
      %s181 = sadd.s32 %s180, 1
      %p184 = scmp.eq.s32.totalorder %s20, 1
      %p185 = scmp.ne.s32.totalorder %s180, %s182
      %p186 = scmp.eq.s32.totalorder %s20, 0
      %p187 = por %p185, %p186
      %p188 = scmp.ne.s32.totalorder %s180, %s182
      %p189 = scmp.eq.s32.totalorder %s25, 1
      %p190 = por %p188, %p189
      %p191 = scmp.ne.s32.totalorder %s182, %s183
      %p192 = scmp.eq.s32.totalorder %s25, 0
      %p193 = por %p191, %p192
      %p194 = scmp.ne.s32.totalorder %s182, %s183
      %p195 = scmp.eq.s32.totalorder %s26, 1
      %p196 = por %p194, %p195
      %p198 = scmp.ne.s32.totalorder %s183, %s197
      %p199 = scmp.eq.s32.totalorder %s26, 0
      %p200 = por %p198, %p199
      %s201 = ssub.s32 %s27, %s39
      %s202 = ssub.s32 %s28, %s35
      %s203 = sor.u32 %s201, %s202
      %p204 = scmp.eq.s32.totalorder %s203, 0
      %s206 = sadd.s32 %s205, 1
      %s207 = scalar_select %p204, %s205, %s206
      %p210 = pneg %p204
      %p211 = scmp.eq.s32.totalorder %s20, 1
      %p212 = por %p210, %p211
      %p213 = scmp.ne.s32.totalorder %s205, %s208
      %p214 = scmp.eq.s32.totalorder %s20, 0
      %p215 = por %p213, %p214
      %p216 = scmp.ne.s32.totalorder %s205, %s208
      %p217 = scmp.eq.s32.totalorder %s25, 1
      %p218 = por %p216, %p217
      %p219 = scmp.ne.s32.totalorder %s208, %s209
      %p220 = scmp.eq.s32.totalorder %s25, 0
      %p221 = por %p219, %p220
      %p222 = scmp.ne.s32.totalorder %s208, %s209
      %p223 = scmp.eq.s32.totalorder %s26, 1
      %p224 = por %p222, %p223
      %p226 = scmp.ne.s32.totalorder %s209, %s225
      %p227 = scmp.eq.s32.totalorder %s26, 0
      %p228 = por %p226, %p227
      %p229 = scmp.le.s32.totalorder 1, %s20
      %p230 = scmp.lt.s32.totalorder %s20, 3
      %p231 = pnand %p229, %p230
      %p232 = pneg %p231
      // Predicated region
      $region9: #{tpu_custom_call.1} parent=5 // pred_check
        _
      $region10: #{tpu_custom_call.1} parent=5 // pred_check_branch
        %234 = sbr.rel (%p231) target = $region12
      $region11: #{tpu_custom_call.1} parent=5 // pred_region
        %s235 = ssub.s32 %s20, 1
        // Predicated region
        $region13: #{tpu_custom_call.1} parent=11 // pred_check
          %p236 = pneg %p109
        $region14: #{tpu_custom_call.1} parent=11 // pred_check_branch
          %238 = sbr.rel (%p236) target = $region16
        $region15: #{tpu_custom_call.1} parent=11 // pred_region
          _
        $region16: #{tpu_custom_call.1} parent=11 // pred_fallthru
          _
        // Predicated region
        $region17: #{tpu_custom_call.1} parent=11 // pred_check
          %p239 = pneg %p130
        $region18: #{tpu_custom_call.1} parent=11 // pred_check_branch
          %241 = sbr.rel (%p239) target = $region20
        $region19: #{tpu_custom_call.1} parent=11 // pred_region
          _
        $region20: #{tpu_custom_call.1} parent=11 // pred_fallthru
          _
        // Predicated region
        $region21: #{tpu_custom_call.1} parent=11 // pred_check
          %p242 = pneg %p151
        $region22: #{tpu_custom_call.1} parent=11 // pred_check_branch
          %244 = sbr.rel (%p242) target = $region24
        $region23: #{tpu_custom_call.1} parent=11 // pred_region
          %246 = vsyncadd [#allocation7], 0
          %s247 = sshll.u32 %s4, 4
          %s248 = int_to_ptr.hbm [resolvable:$true] %s247
          %s249 = sshll.u32 [#allocation6], 4
          %s250 = int_to_ptr.vmem [resolvable:$true] %s249
          %255 = dma.hbm_to_vmem [thread:$0]  %s248, 2048, %s250, [#allocation7], 128, 128, 8
        $region24: #{tpu_custom_call.1} parent=11 // pred_fallthru
          _
        // Predicated region
        $region25: #{tpu_custom_call.1} parent=11 // pred_check
          %p256 = pneg %p172
        $region26: #{tpu_custom_call.1} parent=11 // pred_check_branch
          %258 = sbr.rel (%p256) target = $region28
        $region27: #{tpu_custom_call.1} parent=11 // pred_region
          %260 = vsyncadd [#allocation7], 0
          %s261 = sshll.u32 %s5, 4
          %s262 = int_to_ptr.hbm [resolvable:$true] %s261
          %s263 = sshll.u32 [#allocation8], 4
          %s264 = int_to_ptr.vmem [resolvable:$true] %s263
          %269 = dma.hbm_to_vmem [thread:$0]  %s262, 2048, %s264, [#allocation7], 128, 128, 8
        $region28: #{tpu_custom_call.1} parent=11 // pred_fallthru
          _
        // Predicated region
        $region29: #{tpu_custom_call.1} parent=11 // pred_check
          %p270 = pneg %p193
        $region30: #{tpu_custom_call.1} parent=11 // pred_check_branch
          %272 = sbr.rel (%p270) target = $region32
        $region31: #{tpu_custom_call.1} parent=11 // pred_region
          _
        $region32: #{tpu_custom_call.1} parent=11 // pred_fallthru
          _
      $region12: #{tpu_custom_call.1} parent=5 // pred_fallthru
        _
      %p273 = scmp.lt.s32.totalorder %s20, 2
      // Predicated region
      $region33: #{tpu_custom_call.1} parent=5 // pred_check
        %p274 = pneg %p273
      $region34: #{tpu_custom_call.1} parent=5 // pred_check_branch
        %276 = sbr.rel (%p274) target = $region36
      $region35: #{tpu_custom_call.1} parent=5 // pred_region
        // Predicated region
        $region37: #{tpu_custom_call.1} parent=35 // pred_check
          %p277 = pneg %p54
        $region38: #{tpu_custom_call.1} parent=35 // pred_check_branch
          %279 = sbr.rel (%p277) target = $region40
        $region39: #{tpu_custom_call.1} parent=35 // pred_region
          %s280 = sand.u32 %s44, 1
          %s281 = scalar_lea.sflag [#allocation4], %s280
          %s282 = sand.u32 %s44, 1
          %s283 = smul.addr %s282, 16
          %s284 = scalar_lea.vmem [#allocation3], %s283
          %s285 = smul.u32 2, %s28
          %287 = vsyncadd %s281, 0
          %s288 = smul.addr %s27, 2
          %s289 = sadd.s32 %s285, %s288
          %s290 = smul.addr %s289, 8
          %s291 = scalar_lea.hbm %s0, %s290
          %s292 = sshll.u32 %s291, 4
          %s293 = int_to_ptr.hbm [resolvable:$true] %s292
          %s294 = sshll.u32 %s284, 4
          %s295 = int_to_ptr.vmem [resolvable:$true] %s294
          %300 = dma.hbm_to_vmem [thread:$0]  %s293, 256, %s295, %s281, 128, 128, 8
        $region40: #{tpu_custom_call.1} parent=35 // pred_fallthru
          _
        // Predicated region
        $region41: #{tpu_custom_call.1} parent=35 // pred_check
          %p301 = pneg %p82
        $region42: #{tpu_custom_call.1} parent=35 // pred_check_branch
          %303 = sbr.rel (%p301) target = $region44
        $region43: #{tpu_custom_call.1} parent=35 // pred_region
          %p304 = scmp.lt.s32.totalorder %s27, 1
          %s305 = scalar_select %p304, %s27, 1
          %p306 = scmp.lt.s32.totalorder %s28, 0
          %s307 = scalar_select %p306, %s28, 0
          %s308 = sadd.s32 %s307, %s305
          %s309 = smul.addr %s308, 4
          %s310 = scalar_lea.vmem %s1, %s309
        $region44: #{tpu_custom_call.1} parent=35 // pred_fallthru
          _
      $region36: #{tpu_custom_call.1} parent=5 // pred_fallthru
        _
      %p311 = scmp.le.s32.totalorder 1, %s20
      %p312 = scmp.lt.s32.totalorder %s20, 3
      %p313 = pnand %p311, %p312
      %p314 = pneg %p313
      // Predicated region
      $region45: #{tpu_custom_call.1} parent=5 // pred_check
        _
      $region46: #{tpu_custom_call.1} parent=5 // pred_check_branch
        %316 = sbr.rel (%p313) target = $region48
      $region47: #{tpu_custom_call.1} parent=5 // pred_region
        %s317 = ssub.s32 %s20, 1
        %s318 = sand.u32 %s47, 1
        %s319 = scalar_lea.sflag [#allocation4], %s318
        %s320 = sand.u32 %s47, 1
        %s321 = smul.addr %s320, 16
        %s322 = scalar_lea.vmem [#allocation3], %s321
        // Predicated region
        $region49: #{tpu_custom_call.1} parent=47 // pred_check
          %p323 = pneg %p60
        $region50: #{tpu_custom_call.1} parent=47 // pred_check_branch
          %325 = sbr.rel (%p323) target = $region52
        $region51: #{tpu_custom_call.1} parent=47 // pred_region
          %327 = dma.done %s319, 256
        $region52: #{tpu_custom_call.1} parent=47 // pred_fallthru
          _
        // Predicated region
        $region53: #{tpu_custom_call.1} parent=47 // pred_check
          %p328 = pneg %p151
        $region54: #{tpu_custom_call.1} parent=47 // pred_check_branch
          %330 = sbr.rel (%p328) target = $region56
        $region55: #{tpu_custom_call.1} parent=47 // pred_region
          %332 = dma.done [#allocation7], 2048
        $region56: #{tpu_custom_call.1} parent=47 // pred_fallthru
          _
        // Predicated region
        $region57: #{tpu_custom_call.1} parent=47 // pred_check
          %p333 = pneg %p172
        $region58: #{tpu_custom_call.1} parent=47 // pred_check_branch
          %335 = sbr.rel (%p333) target = $region60
        $region59: #{tpu_custom_call.1} parent=47 // pred_region
          %337 = dma.done [#allocation7], 2048
        $region60: #{tpu_custom_call.1} parent=47 // pred_fallthru
          _
        %s338 = sand.u32 %s47, 1
        %s339 = scalar_lea.sflag [#allocation4], %s338
        %s340 = sand.u32 %s47, 1
        %s341 = smul.addr %s340, 16
        %s342 = scalar_lea.vmem [#allocation3], %s341
        %p343 = pneg %p60
        %p344 = pneg %p57
        %p345 = scmp.lt.s32.totalorder %s29, 1
        %s346 = scalar_select %p345, %s29, 1
        %p347 = scmp.lt.s32.totalorder %s30, 0
        %s348 = scalar_select %p347, %s30, 0
        %s349 = sadd.s32 %s348, %s346
        %s350 = smul.addr %s349, 4
        %s351 = scalar_lea.vmem %s1, %s350
        %p352 = pneg %p88
        %p353 = pneg %p85
        %p354 = pneg %p109
        %p355 = pneg %p106
        %p356 = pneg %p130
        %p357 = pneg %p127
        %p358 = pneg %p151
        %p359 = pneg %p148
        %p360 = pneg %p172
        %p361 = pneg %p169
        %p362 = pneg %p193
        %p363 = pneg %p190
        %p364 = pneg %p221
        %p365 = pneg %p218
        %s366 = sand.u32 %s208, 1
        %s367 = scalar_lea.sflag [#allocation5], %s366
        %s368 = sand.u32 %s208, 1
        %s369 = smul.addr %s368, 16
        %s370 = scalar_lea.vmem [#allocation9], %s369
        %s371 = smul.u32 2, %s30
        %p372 = scmp.lt.s32.totalorder %s29, 1
        %s373 = scalar_select %p372, %s29, 1
        %p374 = scmp.lt.s32.totalorder %s30, 0
        %s375 = scalar_select %p374, %s30, 0
        %s376 = sadd.s32 %s375, %s373
        %s377 = smul.addr %s376, 4
        %s378 = scalar_lea.vmem %s1, %s377
        %s379 = smul.u32 2, %s30
        %v380 = vld [vmem:[%s322] sm:$0xff]
        %v381 = vld [vmem:[%s322 + $0x8] sm:$0xff]
        %v382 = vld [vmem:[%s378] sm:$0x7]
        %vm385 = vcmask 1042432
        %v386 = vrot.slane %v380, 5
        %v387 = vrot.slane %v381, 5
        %v388 = vsel %vm385, %v386, %v387
        %v392 = vsel %vm385, %v382, %v386
        %v393 = vlaneseq
        %v394 = vand.u32 %v393, 127
        %vm395 = vcmp.lt.s32.totalorder %v394, 32
        %396 = vadd.xlane.f32.xlu0 %v392
        %v397 = vpop.xlane.xlu0 %396
        %398 = vadd.xlane.f32.xlu0 %v388
        %v399 = vpop.xlane.xlu0 %398
        %v400 = vsel %vm385, %v387, 0.0
        %401 = vadd.xlane.f32.xlu0 %v400
        %v402 = vpop.xlane.xlu0 %401
        %v403 = vmul.f32 %v397, 0.03125
        %v404 = vmul.f32 %v399, 0.03125
        %v405 = vmul.f32 %v402, 0.03125
        %v406 = vsub.f32 %v392, %v403
        %v407 = vsub.f32 %v388, %v404
        %v408 = vsub.f32 %v387, %v405
        %v409 = vsel %vm395, 1, 0
        %vm410 = vcmp.eq.s32.totalorder %v409, 1
        %v411 = vsel %vm410, %v406, 0.0
        %v412 = vsel %vm410, %v407, 0.0
        %v413 = vsel %vm410, %v408, 0.0
        %v414 = vmul.f32 %v411, %v411
        %v415 = vmul.f32 %v412, %v412
        %v416 = vmul.f32 %v413, %v413
        %417 = vadd.xlane.f32.xlu0 %v414
        %v418 = vpop.xlane.xlu0 %417
        %419 = vadd.xlane.f32.xlu0 %v415
        %v420 = vpop.xlane.xlu0 %419
        %v421 = vsel %vm385, %v416, 0.0
        %422 = vadd.xlane.f32.xlu0 %v421
        %v423 = vpop.xlane.xlu0 %422
        %v424 = vmul.f32 %v418, 0.03125
        %v425 = vmul.f32 %v420, 0.03125
        %v426 = vmul.f32 %v423, 0.03125
        %v427 = vadd.f32 %v424, 1e-05
        %v428 = vadd.f32 %v425, 1e-05
        %v429 = vadd.f32 %v426, 1e-05
        %v430 = vrsqrt.pop %v427
        %v431 = vmul.f32 %v430, %v427
        %v432 = vmul.f32 %v431, %v430
        %v433 = vmul.f32 0.5, %v432
        %v434 = vsub.f32 1.5, %v433
        %v435 = vmul.f32 %v430, %v434
        %vm436 = vweird.f32 %v427
        %vm437 = vweird.f32 %v430
        %vm438 = vmor %vm436, %vm437
        %v439 = vsel %vm438, %v430, %v435
        %v440 = vrsqrt.pop %v428
        %v441 = vmul.f32 %v440, %v428
        %v442 = vmul.f32 %v441, %v440
        %v443 = vmul.f32 0.5, %v442
        %v444 = vsub.f32 1.5, %v443
        %v445 = vmul.f32 %v440, %v444
        %vm446 = vweird.f32 %v428
        %vm447 = vweird.f32 %v440
        %vm448 = vmor %vm446, %vm447
        %v449 = vsel %vm448, %v440, %v445
        %v450 = vrsqrt.pop %v429
        %v451 = vmul.f32 %v450, %v429
        %v452 = vmul.f32 %v451, %v450
        %v453 = vmul.f32 0.5, %v452
        %v454 = vsub.f32 1.5, %v453
        %v455 = vmul.f32 %v450, %v454
        %vm456 = vweird.f32 %v429
        %vm457 = vweird.f32 %v450
        %vm458 = vmor %vm456, %vm457
        %v459 = vsel %vm458, %v450, %v455
        %v460 = vmul.f32 %v411, %v439
        %v461 = vmul.f32 %v412, %v449
        %v462 = vmul.f32 %v413, %v459
        %v463 = vld [vmem:[%s2] sm:$0x1]
        %v465 = vperm.slane %v463, 0
        %v467 = vmul.f32 %v460, %v465
        %v468 = vmul.f32 %v461, %v465
        %v469 = vmul.f32 %v462, %v465
        %v470 = vld [vmem:[%s3] sm:$0x1]
        %v472 = vperm.slane %v470, 0
        %v474 = vadd.f32 %v467, %v472
        %v475 = vadd.f32 %v468, %v472
        %v476 = vadd.f32 %v469, %v472
        %v477 = vlaneseq
        %v478 = vshrl.u32 %v477, 7
        %v479 = vadd.s32 %v478, 8
        %v480 = vadd.s32 %v478, 16
        %s481 = smul.u32 %s30, 16
        %v482 = vstv %s481
        %v483 = vadd.s32 %v482, %v478
        %v484 = vadd.s32 %v482, %v479
        %v485 = vadd.s32 %v482, %v480
        %v486 = vsub.s32 %v483, 3
        %v487 = vsub.s32 %v484, 3
        %v488 = vsub.s32 %v485, 3
        %vm489 = vcmp.ge.s32.totalorder %v486, 0
        %vm490 = vcmp.ge.s32.totalorder %v487, 0
        %vm491 = vcmp.ge.s32.totalorder %v488, 0
        %v492 = vsel %vm489, 1, 0
        %v493 = vsel %vm490, 1, 0
        %v494 = vsel %vm491, 1, 0
        %vm495 = vcmp.eq.s32.totalorder %v492, 1
        %vm496 = vcmp.eq.s32.totalorder %v493, 1
        %vm497 = vcmp.eq.s32.totalorder %v494, 1
        %v498 = vsel %vm495, %v474, 0.0
        %v499 = vsel %vm496, %v475, 0.0
        %v500 = vsel %vm497, %v476, 0.0
        %v501 = vld [vmem:[#allocation6] sm:$0xff]
        %v502 = vld [vmem:[#allocation6 + $0x8] sm:$0xff]
        %v503 = vld [vmem:[#allocation6 + $0x10] sm:$0xff]
        %v504 = vld [vmem:[#allocation6 + $0x18] sm:$0xff]
        %v505 = vld [vmem:[#allocation6 + $0x20] sm:$0xff]
        %v506 = vld [vmem:[#allocation6 + $0x28] sm:$0xff]
        %v507 = vld [vmem:[#allocation6 + $0x30] sm:$0xff]
        %v508 = vld [vmem:[#allocation6 + $0x38] sm:$0xff]
        %v509 = vld [vmem:[#allocation6 + $0x40] sm:$0xff]
        %v510 = vld [vmem:[#allocation6 + $0x48] sm:$0xff]
        %v511 = vld [vmem:[#allocation6 + $0x50] sm:$0xff]
        %v512 = vld [vmem:[#allocation6 + $0x58] sm:$0xff]
        %v513 = vld [vmem:[#allocation6 + $0x60] sm:$0xff]
        %v514 = vld [vmem:[#allocation6 + $0x68] sm:$0xff]
        %v515 = vld [vmem:[#allocation6 + $0x70] sm:$0xff]
        %v516 = vld [vmem:[#allocation6 + $0x78] sm:$0xff]
        %517 = vmatpush.msra.mxu0 %v516
        %518 = vmatpush.msra.mxu0 %v515
        %519 = vmatpush.msra.mxu0 %v514
        %520 = vmatpush.msra.mxu0 %v513
        %521 = vmatpush.msra.mxu0 %v512
        %522 = vmatpush.msra.mxu0 %v511
        %523 = vmatpush.msra.mxu0 %v510
        %524 = vmatpush.msra.mxu0 %v509
        %525 = vmatpush.msra.mxu0 %v508
        %526 = vmatpush.msra.mxu0 %v507
        %527 = vmatpush.msra.mxu0 %v506
        %528 = vmatpush.msra.mxu0 %v505
        %529 = vmatpush.msra.mxu0 %v504
        %530 = vmatpush.msra.mxu0 %v503
        %531 = vmatpush.msra.mxu0 %v502
        %532 = vmatpush.msra.mxu0 %v501
        %533 = vmatmul.f32.gmra.mxu0 %v498
        %v534 = vpop.f32.mrf.mxu0
        %v535 = vadd.f32 0.0, %v534
        %536 = vmatmul.f32.gmra.mxu0 %v499
        %v537 = vpop.f32.mrf.mxu0
        %v538 = vadd.f32 0.0, %v537
        %539 = vmatmul.f32.gmra.mxu0 %v500
        %v540 = vpop.f32.mrf.mxu0
        %v541 = vadd.f32 0.0, %v540
        %542 = vdwg.mxu0
        %543 = vst [vmem:[#allocation2] sm:$0xff] %v535
        %544 = vst [vmem:[#allocation2 + $0x8] sm:$0xff] %v538
        %545 = vst [vmem:[#allocation2 + $0x10] sm:$0x7] %v541
        %v546 = vld [vmem:[%s6] sm:$0x1]
        %v548 = vperm.slane %v546, 0
        %v550 = vld [vmem:[#allocation2] sm:$0xff]
        %v551 = vld [vmem:[#allocation2 + $0x8] sm:$0xff]
        %v552 = vadd.f32 %v550, %v548
        %v553 = vadd.f32 %v551, %v548
        %v554 = vtanh.pop %v552
        %v555 = vtanh.pop %v553
        %v556 = vld [vmem:[#allocation2 + $0x1] sm:$0xff]
        %v557 = vld [vmem:[#allocation2 + $0x9] sm:$0xff]
        %v558 = vld [vmem:[#allocation8] sm:$0xff]
        %v559 = vld [vmem:[#allocation8 + $0x8] sm:$0xff]
        %v560 = vld [vmem:[#allocation8 + $0x10] sm:$0xff]
        %v561 = vld [vmem:[#allocation8 + $0x18] sm:$0xff]
        %v562 = vld [vmem:[#allocation8 + $0x20] sm:$0xff]
        %v563 = vld [vmem:[#allocation8 + $0x28] sm:$0xff]
        %v564 = vld [vmem:[#allocation8 + $0x30] sm:$0xff]
        %v565 = vld [vmem:[#allocation8 + $0x38] sm:$0xff]
        %v566 = vld [vmem:[#allocation8 + $0x40] sm:$0xff]
        %v567 = vld [vmem:[#allocation8 + $0x48] sm:$0xff]
        %v568 = vld [vmem:[#allocation8 + $0x50] sm:$0xff]
        %v569 = vld [vmem:[#allocation8 + $0x58] sm:$0xff]
        %v570 = vld [vmem:[#allocation8 + $0x60] sm:$0xff]
        %v571 = vld [vmem:[#allocation8 + $0x68] sm:$0xff]
        %v572 = vld [vmem:[#allocation8 + $0x70] sm:$0xff]
        %v573 = vld [vmem:[#allocation8 + $0x78] sm:$0xff]
        %574 = vmatpush.msra.mxu0 %v573
        %575 = vmatpush.msra.mxu0 %v572
        %576 = vmatpush.msra.mxu0 %v571
        %577 = vmatpush.msra.mxu0 %v570
        %578 = vmatpush.msra.mxu0 %v569
        %579 = vmatpush.msra.mxu0 %v568
        %580 = vmatpush.msra.mxu0 %v567
        %581 = vmatpush.msra.mxu0 %v566
        %582 = vmatpush.msra.mxu0 %v565
        %583 = vmatpush.msra.mxu0 %v564
        %584 = vmatpush.msra.mxu0 %v563
        %585 = vmatpush.msra.mxu0 %v562
        %586 = vmatpush.msra.mxu0 %v561
        %587 = vmatpush.msra.mxu0 %v560
        %588 = vmatpush.msra.mxu0 %v559
        %589 = vmatpush.msra.mxu0 %v558
        %590 = vmatmul.f32.gmra.mxu0 %v554
        %v591 = vpop.f32.mrf.mxu0
        %v592 = vadd.f32 0.0, %v591
        %593 = vmatmul.f32.gmra.mxu0 %v555
        %v594 = vpop.f32.mrf.mxu0
        %v595 = vadd.f32 0.0, %v594
        %596 = vdwg.mxu0
        %v597 = vadd.f32 %v556, %v592
        %v598 = vadd.f32 %v557, %v595
        %v599 = vadd.f32 %v597, %v548
        %v600 = vadd.f32 %v598, %v548
        %v601 = vtanh.pop %v599
        %v602 = vtanh.pop %v600
        %v603 = vld [vmem:[#allocation2 + $0x2] sm:$0xff]
        %v604 = vld [vmem:[#allocation2 + $0xa] sm:$0xff]
        %605 = vmatpush.msra.mxu0 %v573
        %606 = vmatpush.msra.mxu0 %v572
        %607 = vmatpush.msra.mxu0 %v571
        %608 = vmatpush.msra.mxu0 %v570
        %609 = vmatpush.msra.mxu0 %v569
        %610 = vmatpush.msra.mxu0 %v568
        %611 = vmatpush.msra.mxu0 %v567
        %612 = vmatpush.msra.mxu0 %v566
        %613 = vmatpush.msra.mxu0 %v565
        %614 = vmatpush.msra.mxu0 %v564
        %615 = vmatpush.msra.mxu0 %v563
        %616 = vmatpush.msra.mxu0 %v562
        %617 = vmatpush.msra.mxu0 %v561
        %618 = vmatpush.msra.mxu0 %v560
        %619 = vmatpush.msra.mxu0 %v559
        %620 = vmatpush.msra.mxu0 %v558
        %621 = vmatmul.f32.gmra.mxu0 %v601
        %v622 = vpop.f32.mrf.mxu0
        %v623 = vadd.f32 0.0, %v622
        %624 = vmatmul.f32.gmra.mxu0 %v602
        %v625 = vpop.f32.mrf.mxu0
        %v626 = vadd.f32 0.0, %v625
        %627 = vdwg.mxu0
        %v628 = vadd.f32 %v603, %v623
        %v629 = vadd.f32 %v604, %v626
        %v630 = vadd.f32 %v628, %v548
        %v631 = vadd.f32 %v629, %v548
        %v632 = vtanh.pop %v630
        %v633 = vtanh.pop %v631
        %v634 = vld [vmem:[#allocation2 + $0x3] sm:$0xff]
        %v635 = vld [vmem:[#allocation2 + $0xb] sm:$0xff]
        %636 = vmatpush.msra.mxu0 %v573
        %637 = vmatpush.msra.mxu0 %v572
        %638 = vmatpush.msra.mxu0 %v571
        %639 = vmatpush.msra.mxu0 %v570
        %640 = vmatpush.msra.mxu0 %v569
        %641 = vmatpush.msra.mxu0 %v568
        %642 = vmatpush.msra.mxu0 %v567
        %643 = vmatpush.msra.mxu0 %v566
        %644 = vmatpush.msra.mxu0 %v565
        %645 = vmatpush.msra.mxu0 %v564
        %646 = vmatpush.msra.mxu0 %v563
        %647 = vmatpush.msra.mxu0 %v562
        %648 = vmatpush.msra.mxu0 %v561
        %649 = vmatpush.msra.mxu0 %v560
        %650 = vmatpush.msra.mxu0 %v559
        %651 = vmatpush.msra.mxu0 %v558
        %652 = vmatmul.f32.gmra.mxu0 %v632
        %v653 = vpop.f32.mrf.mxu0
        %v654 = vadd.f32 0.0, %v653
        %655 = vmatmul.f32.gmra.mxu0 %v633
        %v656 = vpop.f32.mrf.mxu0
        %v657 = vadd.f32 0.0, %v656
        %658 = vdwg.mxu0
        %v659 = vadd.f32 %v634, %v654
        %v660 = vadd.f32 %v635, %v657
        %v661 = vadd.f32 %v659, %v548
        %v662 = vadd.f32 %v660, %v548
        %v663 = vtanh.pop %v661
        %v664 = vtanh.pop %v662
        %v665 = vadd.f32 %v380, %v663
        %v666 = vadd.f32 %v381, %v664
        %667 = vst [vmem:[%s370] sm:$0xff] %v665
        %668 = vst [vmem:[%s370 + $0x8] sm:$0xff] %v666
        %s669 = sand.u32 %s208, 1
        %s670 = scalar_lea.sflag [#allocation5], %s669
        %s671 = sand.u32 %s208, 1
        %s672 = smul.addr %s671, 16
        %s673 = scalar_lea.vmem [#allocation9], %s672
        // Predicated region
        $region61: #{tpu_custom_call.1} parent=47 // pred_check
          %p674 = pneg %p218
        $region62: #{tpu_custom_call.1} parent=47 // pred_check_branch
          %676 = sbr.rel (%p674) target = $region64
        $region63: #{tpu_custom_call.1} parent=47 // pred_region
          %s677 = smul.u32 2, %s30
          %679 = vsyncadd %s670, 0
          %s680 = smul.addr %s29, 2
          %s681 = sadd.s32 %s677, %s680
          %s682 = smul.addr %s681, 8
          %s683 = scalar_lea.hbm %s7, %s682
          %s684 = sshll.u32 %s673, 4
          %s685 = int_to_ptr.vmem [resolvable:$true] %s684
          %s686 = sshll.u32 %s683, 4
          %s687 = int_to_ptr.hbm [resolvable:$true] %s686
          %692 = dma.vmem_to_hbm [thread:$0]  %s685, 256, %s687, %s670, 128, 128, 8
        $region64: #{tpu_custom_call.1} parent=47 // pred_fallthru
          _
      $region48: #{tpu_custom_call.1} parent=5 // pred_fallthru
        _
      %p693 = scmp.le.s32.totalorder 2, %s20
      // Predicated region
      $region65: #{tpu_custom_call.1} parent=5 // pred_check
        %p694 = pneg %p693
      $region66: #{tpu_custom_call.1} parent=5 // pred_check_branch
        %696 = sbr.rel (%p694) target = $region68
      $region67: #{tpu_custom_call.1} parent=5 // pred_region
        %s697 = ssub.s32 %s20, 2
        // Predicated region
        $region69: #{tpu_custom_call.1} parent=67 // pred_check
          %p698 = pneg %p224
        $region70: #{tpu_custom_call.1} parent=67 // pred_check_branch
          %700 = sbr.rel (%p698) target = $region72
        $region71: #{tpu_custom_call.1} parent=67 // pred_region
          %s701 = sand.u32 %s209, 1
          %s702 = scalar_lea.sflag [#allocation5], %s701
          %s703 = sand.u32 %s209, 1
          %s704 = smul.addr %s703, 16
          %s705 = scalar_lea.vmem [#allocation9], %s704
          %707 = dma.done %s702, 256
        $region72: #{tpu_custom_call.1} parent=67 // pred_fallthru
          _
      $region68: #{tpu_custom_call.1} parent=5 // pred_fallthru
        _
    $region6: #{tpu_custom_call.1} parent=1 // loop_footer
      %s24 = sadd.s32 1, %s20
    $region7: #{tpu_custom_call.1} parent=1 // loop_footer_branch
      %19 = sbr.rel target = $region3
    $region8: #{tpu_custom_call.1} parent=1 // loop_exit
      _
    %708 = vsyncpa [#allocation4], 1
    %s709 = scalar_lea.sflag [#allocation4], 1
    %710 = vsyncpa %s709, 1
    %711 = vsyncpa [#allocation7], 1
    %712 = vsyncpa [#allocation5], 1
    %s713 = scalar_lea.sflag [#allocation5], 1
    %714 = vsyncpa %s713, 1

</llo_original>
